<compile_context>
chip_gen: v7x
topology: tpu7x:2x2x1
jax: 0.10.0
libtpu: 0.0.40
codegen_flags: <defaults>
</compile_context>

<pallas_src>
import math

import jax
import jax.numpy as jnp
from jax import lax
from jax.experimental import pallas as pl
from jax.experimental.pallas import tpu as pltpu


def _make_attention_kernel(scale, has_mask, return_weights):
    def kernel(*refs):
        idx = 0
        vl_ref = None
        if has_mask:
            vl_ref = refs[0]
            idx = 1
        q_ref, k_ref, v_ref = refs[idx], refs[idx + 1], refs[idx + 2]
        out_refs = refs[idx + 3:]
        o_ref = out_refs[0]

        q = q_ref[...]            # (TB, TQ, D)
        k = k_ref[...]            # (TB, K,  D)
        v = v_ref[...]            # (TB, K,  Dv)

        tb = q.shape[0]
        kk = k.shape[1]

        # scores = Q K^T / sqrt(d), f32 accumulation on the MXU. The 'bkd'
        # contraction avoids materializing k.T through the XLU.
        scores = jnp.einsum(
            "bqd,bkd->bqk", q, k, preferred_element_type=jnp.float32
        ) * jnp.float32(scale)

        if has_mask:
            # Sequence mask: positions >= valid_len get -1e6 (same constant as
            # the PyTorch reference). Iota is only (TB, 1, K); jnp.where
            # broadcasts it over the Q axis.
            vl = vl_ref[...]      # (TB, 1, 1) or (TB, TQ, 1) int32
            col = lax.broadcasted_iota(jnp.int32, (tb, 1, kk), 2)
            scores = jnp.where(col < vl, scores, jnp.float32(-1000000.0))

        # Numerically-stable softmax, kept in f32 (fast layout on v5e too).
        m = jnp.max(scores, axis=-1, keepdims=True)
        e = jnp.exp(scores - m)
        s = jnp.sum(e, axis=-1, keepdims=True)
        w = e * pl.reciprocal(s, approx=True)   # EUP vrcp -> effectively free

        # TODO(synk): nn.Dropout is stochastic in training mode; eval-mode
        # (identity) semantics are implemented here.

        out = jnp.einsum(
            "bqk,bkv->bqv", w.astype(v.dtype), v,
            preferred_element_type=jnp.float32,
        )
        o_ref[...] = out.astype(o_ref.dtype)

        if return_weights:
            out_refs[1][...] = w.astype(out_refs[1].dtype)

    return kernel


def _largest_divisor_leq(n, cap):
    cap = max(1, min(n, int(cap)))
    for d in range(cap, 0, -1):
        if n % d == 0:
            return d
    return 1


def dot_product_attention(queries, keys, values, valid_lens=None, *,
                          return_weights=False, weights_dtype=None,
                          block_q=None, block_b=None):
    """Scaled dot-product attention with masked softmax.

    queries: (B, Q, D), keys: (B, K, D), values: (B, K, Dv)
    valid_lens: None, (B,) or (B, Q) integer lengths.
    Returns output (B, Q, Dv); with return_weights=True also returns the
    attention weights (B, Q, K).
    """
    B, Q, D = queries.shape
    _, K, _ = keys.shape
    _, _, Dv = values.shape
    scale = 1.0 / math.sqrt(D)
    if weights_dtype is None:
        weights_dtype = jnp.float32

    has_mask = valid_lens is not None

    # ---- valid_lens -> small int32 tile (broadcast inside the kernel) -------
    vl = None
    vl_is_per_query = False
    if has_mask:
        if valid_lens.ndim == 1:
            vl = valid_lens.astype(jnp.int32).reshape(B, 1, 1)
        else:                                                  # (B, Q) per-query lens
            vl = valid_lens.astype(jnp.int32).reshape(B, Q, 1)
            vl_is_per_query = True

    # ---- tile selection ------------------------------------------------------
    itemsize = jnp.dtype(queries.dtype).itemsize
    w_itemsize = jnp.dtype(weights_dtype).itemsize

    if block_q is not None:
        tq = block_q
    elif Q <= 256 or (Q % 8) != 0:
        tq = Q                       # full Q (also covers non-sublane-aligned Q)
    else:
        tq = 256                     # multiple of 8, good pipeline granularity

    if block_b is not None:
        tb = block_b
    else:
        # Pack batch items so TB*TQ rows approach an MXU pass when Q is small.
        tb = _largest_divisor_leq(B, max(1, 256 // max(tq, 1)))

    def ws_bytes(tb_, tq_):
        in_b = tb_ * (tq_ * D + K * D + K * Dv) * itemsize
        if has_mask:
            in_b += tb_ * (tq_ if vl_is_per_query else 1) * 4
        out_b = tb_ * tq_ * Dv * itemsize
        w_b = tb_ * tq_ * K * w_itemsize if return_weights else 0
        return 2 * (in_b + out_b + w_b)          # double-buffered pipeline

    # Conservative budget so double-buffered blocks (+ f32 score intermediates)
    # fit v7x's 64 MiB VMEM as well as v5e/v6e's 128 MiB.
    budget = 24 << 20
    while tb > 1 and ws_bytes(tb, tq) > budget:
        tb = _largest_divisor_leq(B, tb - 1)
    while ws_bytes(tb, tq) > budget and tq >= 16 and tq % 16 == 0:
        tq //= 2

    grid = (B // tb, pl.cdiv(Q, tq))

    # Scoped-VMEM limit: defaults (16 MiB v5e / 32 MiB v6e,v7x) are below what
    # bigger tiles need; stay under v7x's 64 MiB physical VMEM.
    vmem_limit = int(min(max(ws_bytes(tb, tq) + (16 << 20), 32 << 20), 56 << 20))

    # ---- specs ---------------------------------------------------------------
    in_specs = []
    args = []
    if has_mask:
        if vl_is_per_query:
            in_specs.append(pl.BlockSpec((tb, tq, 1), lambda b, qi: (b, qi, 0)))
        else:
            in_specs.append(pl.BlockSpec((tb, 1, 1), lambda b, qi: (b, 0, 0)))
        args.append(vl)

    in_specs += [
        pl.BlockSpec((tb, tq, D), lambda b, qi: (b, qi, 0)),   # Q tile
        pl.BlockSpec((tb, K, D), lambda b, qi: (b, 0, 0)),     # K: constant over qi
        pl.BlockSpec((tb, K, Dv), lambda b, qi: (b, 0, 0)),    # V: constant over qi
    ]
    args += [queries, keys, values]

    o_shape = jax.ShapeDtypeStruct((B, Q, Dv), queries.dtype)
    o_spec = pl.BlockSpec((tb, tq, Dv), lambda b, qi: (b, qi, 0))
    if return_weights:
        out_shape = (o_shape, jax.ShapeDtypeStruct((B, Q, K), weights_dtype))
        out_specs = (o_spec, pl.BlockSpec((tb, tq, K), lambda b, qi: (b, qi, 0)))
    else:
        out_shape = o_shape
        out_specs = o_spec

    kernel = _make_attention_kernel(scale, has_mask, return_weights)

    return pl.pallas_call(
        kernel,
        grid=grid,
        in_specs=in_specs,
        out_specs=out_specs,
        out_shape=out_shape,
        compiler_params=pltpu.CompilerParams(
            dimension_semantics=("parallel", "parallel"),
            vmem_limit_bytes=vmem_limit,
        ),
    )(*args)


def _reference(queries, keys, values, valid_lens):
    d = queries.shape[-1]
    scores = jnp.einsum("bqd,bkd->bqk", queries, keys) / math.sqrt(d)
    if valid_lens is not None:
        col = jnp.arange(scores.shape[-1])
        if valid_lens.ndim == 1:
            mask = col[None, None, :] < valid_lens[:, None, None]
        else:
            mask = col[None, None, :] < valid_lens[:, :, None]
        scores = jnp.where(mask, scores, -1000000.0)
    w = jax.nn.softmax(scores, axis=-1)
    return jnp.einsum("bqk,bkv->bqv", w, values), w


if __name__ == "__main__":
    key = jax.random.PRNGKey(0)
    kq, kk, kv = jax.random.split(key, 3)

    B, Q, K, D, Dv = 2, 8, 8, 32, 32
    queries = jax.random.normal(kq, (B, Q, D), dtype=jnp.float32)
    keys = jax.random.normal(kk, (B, K, D), dtype=jnp.float32)
    values = jax.random.normal(kv, (B, K, Dv), dtype=jnp.float32)
    valid_lens = jnp.array([3, 6], dtype=jnp.int32)

    # Path with the (optional) attention-weights output, 1-D valid_lens.
    out, weights = dot_product_attention(queries, keys, values, valid_lens,
                                         return_weights=True)
    jax.block_until_ready(out)
    jax.block_until_ready(weights)
    ref_out, ref_w = _reference(queries, keys, values, valid_lens)
    # approx reciprocal in the softmax -> slightly relaxed tolerance
    assert jnp.allclose(out, ref_out, atol=2e-3, rtol=2e-3), "output mismatch"
    assert jnp.allclose(weights, ref_w, atol=2e-3, rtol=2e-3), "weights mismatch"

    # Fast path: no mask (valid-lens input, DMA and where() elided), no weights.
    out2 = dot_product_attention(queries, keys, values, None)
    jax.block_until_ready(out2)
    ref_out2, _ = _reference(queries, keys, values, None)
    assert jnp.allclose(out2, ref_out2, atol=2e-3, rtol=2e-3), "output mismatch (no mask)"

    # Per-query (B, Q) valid_lens path (masked_softmax nD semantics).
    valid_lens_2d = jnp.tile(jnp.array([[2, 3, 4, 5, 6, 7, 8, 8]], jnp.int32), (B, 1))
    out3 = dot_product_attention(queries, keys, values, valid_lens_2d)
    jax.block_until_ready(out3)
    ref_out3, _ = _reference(queries, keys, values, valid_lens_2d)
    assert jnp.allclose(out3, ref_out3, atol=2e-3, rtol=2e-3), "output mismatch (2D lens)"

    print("KERNEL_OK")
</pallas_src>

<mosaic_0001>
module attributes {stable_mosaic.version = 11 : i64} {
  func.func @kernel(%arg0: i32, %arg1: i32, %arg2: memref<2x1x1xi32, #tpu.memory_space<vmem>>, %arg3: memref<2x8x32xf32, #tpu.memory_space<vmem>>, %arg4: memref<2x8x32xf32, #tpu.memory_space<vmem>>, %arg5: memref<2x8x32xf32, #tpu.memory_space<vmem>>, %arg6: memref<2x8x32xf32, #tpu.memory_space<vmem>>, %arg7: memref<2x8x8xf32, #tpu.memory_space<vmem>>) attributes {dimension_semantics = [#tpu.dimension_semantics<parallel>, #tpu.dimension_semantics<parallel>], iteration_bounds = array<i64: 1, 1>, scalar_prefetch = 0 : i64, scratch_operands = 0 : i64, tpu.core_type = #tpu.core_type<tc>, window_params = [{transform_indices = @transform_0, window_bounds = array<i64: 2, 1, 1>}, {transform_indices = @transform_1, window_bounds = array<i64: 2, 8, 32>}, {transform_indices = @transform_2, window_bounds = array<i64: 2, 8, 32>}, {transform_indices = @transform_3, window_bounds = array<i64: 2, 8, 32>}, {transform_indices = @transform_4, window_bounds = array<i64: 2, 8, 32>}, {transform_indices = @transform_5, window_bounds = array<i64: 2, 8, 8>}]} {
    %c0 = arith.constant 0 : index
    %c0_0 = arith.constant 0 : index
    %c0_1 = arith.constant 0 : index
    %0 = vector.load %arg3[%c0, %c0_0, %c0_1] : memref<2x8x32xf32, #tpu.memory_space<vmem>>, vector<2x8x32xf32>
    %c0_2 = arith.constant 0 : index
    %c0_3 = arith.constant 0 : index
    %c0_4 = arith.constant 0 : index
    %1 = vector.load %arg4[%c0_2, %c0_3, %c0_4] : memref<2x8x32xf32, #tpu.memory_space<vmem>>, vector<2x8x32xf32>
    %c0_5 = arith.constant 0 : index
    %c0_6 = arith.constant 0 : index
    %c0_7 = arith.constant 0 : index
    %2 = vector.load %arg5[%c0_5, %c0_6, %c0_7] : memref<2x8x32xf32, #tpu.memory_space<vmem>>, vector<2x8x32xf32>
    "tpu.trace_start"() <{level = 10 : i32, message = "bqd,bkd->bqk"}> : () -> ()
    %cst = arith.constant dense<0.000000e+00> : vector<2x8x8xf32>
    %3 = tpu.matmul %0, %1, %cst {dimension_numbers = #tpu.dot_dimension_numbers<[2], [2], [1], [1], [0, 0, 0, 1, 1, 1], [0], [0]>} : vector<2x8x32xf32>, vector<2x8x32xf32>, vector<2x8x8xf32> -> vector<2x8x8xf32>
    "tpu.trace_stop"() : () -> ()
    %cst_8 = arith.constant 0.176776692 : f32
    %4 = vector.broadcast %cst_8 : f32 to vector<2x8x8xf32>
    %5 = arith.mulf %3, %4 : vector<2x8x8xf32>
    %c0_9 = arith.constant 0 : index
    %c0_10 = arith.constant 0 : index
    %c0_11 = arith.constant 0 : index
    %6 = vector.load %arg2[%c0_9, %c0_10, %c0_11] : memref<2x1x1xi32, #tpu.memory_space<vmem>>, vector<2x1x1xi32>
    %7 = tpu.iota {dimensions = array<i32: 2>} : vector<2x1x8xi32>
    %8 = vector.broadcast %6 : vector<2x1x1xi32> to vector<2x1x8xi32>
    %9 = arith.cmpi slt, %7, %8 : vector<2x1x8xi32>
    %cst_12 = arith.constant -1.000000e+06 : f32
    %10 = vector.shape_cast %9 : vector<2x1x8xi1> to vector<2x1x8xi1>
    %11 = vector.broadcast %10 : vector<2x1x8xi1> to vector<2x8x8xi1>
    %12 = vector.broadcast %cst_12 : f32 to vector<2x8x8xf32>
    %13 = arith.select %11, %5, %12 : vector<2x8x8xi1>, vector<2x8x8xf32>
    %cst_13 = arith.constant dense<0xFF800000> : vector<2x8xf32>
    %14 = vector.multi_reduction <maximumf>, %13, %cst_13 [2] : vector<2x8x8xf32> to vector<2x8xf32>
    %15 = vector.shape_cast %14 : vector<2x8xf32> to vector<2x8x1xf32>
    %16 = vector.broadcast %15 : vector<2x8x1xf32> to vector<2x8x8xf32>
    %17 = arith.subf %13, %16 : vector<2x8x8xf32>
    %18 = math.exp %17 : vector<2x8x8xf32>
    %cst_14 = arith.constant dense<0.000000e+00> : vector<2x8xf32>
    %19 = vector.multi_reduction <add>, %18, %cst_14 [2] : vector<2x8x8xf32> to vector<2x8xf32>
    %20 = vector.shape_cast %19 : vector<2x8xf32> to vector<2x8x1xf32>
    %21 = tpu.reciprocal %20 {approx = true} : vector<2x8x1xf32> -> vector<2x8x1xf32>
    %22 = vector.broadcast %21 : vector<2x8x1xf32> to vector<2x8x8xf32>
    %23 = arith.mulf %18, %22 : vector<2x8x8xf32>
    "tpu.trace_start"() <{level = 10 : i32, message = "bqk,bkv->bqv"}> : () -> ()
    %cst_15 = arith.constant dense<0.000000e+00> : vector<2x8x32xf32>
    %24 = tpu.matmul %23, %2, %cst_15 {dimension_numbers = #tpu.dot_dimension_numbers<[2], [1], [1], [2], [0, 0, 0, 1, 1, 2], [0], [0]>} : vector<2x8x8xf32>, vector<2x8x32xf32>, vector<2x8x32xf32> -> vector<2x8x32xf32>
    "tpu.trace_stop"() : () -> ()
    %c0_16 = arith.constant 0 : index
    %c0_17 = arith.constant 0 : index
    %c0_18 = arith.constant 0 : index
    %25 = vector.load %arg6[%c0_16, %c0_17, %c0_18] : memref<2x8x32xf32, #tpu.memory_space<vmem>>, vector<2x8x32xf32>
    tpu.vector_store %arg6[%c0_16, %c0_17, %c0_18], %24 {strides = array<i32>} : memref<2x8x32xf32, #tpu.memory_space<vmem>>, vector<2x8x32xf32>,
    %c0_19 = arith.constant 0 : index
    %c0_20 = arith.constant 0 : index
    %c0_21 = arith.constant 0 : index
    %26 = vector.load %arg7[%c0_19, %c0_20, %c0_21] : memref<2x8x8xf32, #tpu.memory_space<vmem>>, vector<2x8x8xf32>
    tpu.vector_store %arg7[%c0_19, %c0_20, %c0_21], %23 {strides = array<i32>} : memref<2x8x8xf32, #tpu.memory_space<vmem>>, vector<2x8x8xf32>,
    return
  }
  func.func @transform_0(%arg0: i32, %arg1: i32) -> (i32, i32, i32) {
    %c0_i32 = arith.constant 0 : i32
    %c0_i32_0 = arith.constant 0 : i32
    %c0_i32_1 = arith.constant 0 : i32
    return %arg0, %c0_i32, %c0_i32_0 : i32, i32, i32
  }
  func.func @transform_1(%arg0: i32, %arg1: i32) -> (i32, i32, i32) {
    %c0_i32 = arith.constant 0 : i32
    %c0_i32_0 = arith.constant 0 : i32
    return %arg0, %arg1, %c0_i32 : i32, i32, i32
  }
  func.func @transform_2(%arg0: i32, %arg1: i32) -> (i32, i32, i32) {
    %c0_i32 = arith.constant 0 : i32
    %c0_i32_0 = arith.constant 0 : i32
    %c0_i32_1 = arith.constant 0 : i32
    return %arg0, %c0_i32, %c0_i32_0 : i32, i32, i32
  }
  func.func @transform_3(%arg0: i32, %arg1: i32) -> (i32, i32, i32) {
    %c0_i32 = arith.constant 0 : i32
    %c0_i32_0 = arith.constant 0 : i32
    %c0_i32_1 = arith.constant 0 : i32
    return %arg0, %c0_i32, %c0_i32_0 : i32, i32, i32
  }
  func.func @transform_4(%arg0: i32, %arg1: i32) -> (i32, i32, i32) {
    %c0_i32 = arith.constant 0 : i32
    %c0_i32_0 = arith.constant 0 : i32
    return %arg0, %arg1, %c0_i32 : i32, i32, i32
  }
  func.func @transform_5(%arg0: i32, %arg1: i32) -> (i32, i32, i32) {
    %c0_i32 = arith.constant 0 : i32
    %c0_i32_0 = arith.constant 0 : i32
    return %arg0, %arg1, %c0_i32 : i32, i32, i32
  }
}

</mosaic_0001>

<llo_original>
// kernel: tpu_custom_call.1
$region0: #{tpu_custom_call.1}
  #allocation0 [shape = 'u32[]', space=smem, size = 0x4, offset = 0x4, fixed_abs, tag = 'smem constant byte address 0x4 - core index']
  #allocation1 [shape = 'u32[144,128]{1,0:T(1,128)}', space=vmem, size = 0x12000, scoped, tag = 'internal scratch']
  %s0 = inlined_call_operand.vmem [shape: s32[2,1,1], index: 0, kind: input, shape index: {}]
  %s1 = inlined_call_operand.hbm [shape: f32[2,8,32], index: 1, kind: input, shape index: {}]
  %s2 = inlined_call_operand.hbm [shape: f32[2,8,32], index: 2, kind: input, shape index: {}]
  %s3 = inlined_call_operand.hbm [shape: f32[2,8,32], index: 3, kind: input, shape index: {}]
  %s4 = inlined_call_operand.hbm [shape: f32[2,8,32], index: 4, kind: output, shape index: {0}]
  %s5 = inlined_call_operand.hbm [shape: f32[2,8,8], index: 5, kind: output, shape index: {1}]
  %6 = xla_tuple %s4, %s5
  %s7 = sld [smem:[#allocation0]]
  $region46: #{tpu_custom_call.1} parent=0
    _
  %s9 = ssub.s32 1, %s7
  %s10 = scalar_select 0, %s9, %s7
  $region1: #{tpu_custom_call.1} parent=0
    #allocation2 [shape = 'u8[8192]{0}', space=vmem, size = 0x2000, scoped, tag = 'input window, operand 1, single buffered']
    #allocation3 [shape = 's32[1]{0}', space=sflag, size = 0x4, scoped, tag = 'scoped memory for tpu_custom_call.1']
    #allocation4 [shape = 's32[1]{0}', space=sflag, size = 0x4, scoped, tag = 'scoped memory for tpu_custom_call.1']
    #allocation5 [shape = 'u8[8192]{0}', space=vmem, size = 0x2000, scoped, tag = 'input window, operand 2, single buffered']
    #allocation6 [shape = 's32[1]{0}', space=sflag, size = 0x4, scoped, tag = 'scoped memory for tpu_custom_call.1']
    #allocation7 [shape = 'u8[8192]{0}', space=vmem, size = 0x2000, scoped, tag = 'input window, operand 3, single buffered']
    #allocation8 [shape = 'u8[8192]{0}', space=vmem, size = 0x2000, scoped, tag = 'output window, operand 0, single buffered']
    #allocation9 [shape = 'u8[8192]{0}', space=vmem, size = 0x2000, scoped, tag = 'output window, operand 1, single buffered']
    #allocation10 [shape = 's32[1]{0}', space=sflag, size = 0x4, scoped, tag = 'scoped memory for tpu_custom_call.1']
    %11 = vsyncpa [#allocation3], 0
    %12 = vsyncpa [#allocation6], 0
    %13 = vsyncpa [#allocation4], 0
    %14 = vsyncpa [#allocation10], 0
    // Predicated region
    $region2: #{tpu_custom_call.1} parent=1 // pred_check
      _
    $region3: #{tpu_custom_call.1} parent=1 // pred_check_branch
      %16 = sbr.rel (0) target = $region5
    $region4: #{tpu_custom_call.1} parent=1 // pred_region
      _
    $region5: #{tpu_custom_call.1} parent=1 // pred_fallthru
      _
    // Predicated region
    $region6: #{tpu_custom_call.1} parent=1 // pred_check
      _
    $region7: #{tpu_custom_call.1} parent=1 // pred_check_branch
      %18 = sbr.rel (0) target = $region9
    $region8: #{tpu_custom_call.1} parent=1 // pred_region
      %s20 = ssub.s32 256, 256
      %21 = vsyncadd [#allocation3], %s20
      %s22 = sshll.u32 [#allocation2], 4
      %s23 = int_to_ptr.vmem [resolvable:$true] %s22
      %28 = dma.hbm_to_vmem [thread:$0]  %s1, 256, %s23, [#allocation3], 128, 128, 8
    $region9: #{tpu_custom_call.1} parent=1 // pred_fallthru
      _
    // Predicated region
    $region10: #{tpu_custom_call.1} parent=1 // pred_check
      _
    $region11: #{tpu_custom_call.1} parent=1 // pred_check_branch
      %30 = sbr.rel (0) target = $region13
    $region12: #{tpu_custom_call.1} parent=1 // pred_region
      %s32 = ssub.s32 256, 256
      %33 = vsyncadd [#allocation6], %s32
      %s34 = sshll.u32 [#allocation5], 4
      %s35 = int_to_ptr.vmem [resolvable:$true] %s34
      %40 = dma.hbm_to_vmem [thread:$0]  %s2, 256, %s35, [#allocation6], 128, 128, 8
    $region13: #{tpu_custom_call.1} parent=1 // pred_fallthru
      _
    // Predicated region
    $region14: #{tpu_custom_call.1} parent=1 // pred_check
      _
    $region15: #{tpu_custom_call.1} parent=1 // pred_check_branch
      %42 = sbr.rel (0) target = $region17
    $region16: #{tpu_custom_call.1} parent=1 // pred_region
      %s44 = ssub.s32 256, 256
      %45 = vsyncadd [#allocation6], %s44
      %s46 = sshll.u32 [#allocation7], 4
      %s47 = int_to_ptr.vmem [resolvable:$true] %s46
      %52 = dma.hbm_to_vmem [thread:$0]  %s3, 256, %s47, [#allocation6], 128, 128, 8
    $region17: #{tpu_custom_call.1} parent=1 // pred_fallthru
      _
    // Predicated region
    $region18: #{tpu_custom_call.1} parent=1 // pred_check
      _
    $region19: #{tpu_custom_call.1} parent=1 // pred_check_branch
      %54 = sbr.rel (0) target = $region21
    $region20: #{tpu_custom_call.1} parent=1 // pred_region
      %55 = dma.done [#allocation3], 256
    $region21: #{tpu_custom_call.1} parent=1 // pred_fallthru
      _
    // Predicated region
    $region22: #{tpu_custom_call.1} parent=1 // pred_check
      _
    $region23: #{tpu_custom_call.1} parent=1 // pred_check_branch
      %57 = sbr.rel (0) target = $region25
    $region24: #{tpu_custom_call.1} parent=1 // pred_region
      %58 = dma.done [#allocation6], 256
    $region25: #{tpu_custom_call.1} parent=1 // pred_fallthru
      _
    // Predicated region
    $region26: #{tpu_custom_call.1} parent=1 // pred_check
      _
    $region27: #{tpu_custom_call.1} parent=1 // pred_check_branch
      %60 = sbr.rel (0) target = $region29
    $region28: #{tpu_custom_call.1} parent=1 // pred_region
      %61 = dma.done [#allocation6], 256
    $region29: #{tpu_custom_call.1} parent=1 // pred_fallthru
      _
    %v62 = vld [vmem:[#allocation2] sm:$0xff]
    %v63 = vld [vmem:[#allocation2 + $0x8] sm:$0xff]
    %v64 = vld [vmem:[#allocation5] sm:$0xff]
    %v65 = vld [vmem:[#allocation5 + $0x8] sm:$0xff]
    %v66 = vld [vmem:[#allocation7] sm:$0xff]
    %v67 = vld [vmem:[#allocation7 + $0x8] sm:$0xff]
    %vm68 = vcmask 261120
    %v70 = vsel %vm68, %v62, 0
    %v73 = vsel %vm68, %v64, 0
    %75 = vmatprep.subr.mxu0 0.0
    %76 = vmatpush1.xpose.msra.mxu0 %v73
    %77 = vmatprep.subr.mxu0 0.0
    %78 = vmatpush1.xpose.msra.mxu0 0.0
    %79 = vmatprep.subr.mxu0 0.0
    %80 = vmatpush1.xpose.msra.mxu0 0.0
    %81 = vmatprep.subr.mxu0 0.0
    %82 = vmatpush1.xpose.msra.mxu0 0.0
    %83 = vmatprep.subr.mxu0 0.0
    %84 = vmatpush1.xpose.msra.mxu0 0.0
    %85 = vmatprep.subr.mxu0 0.0
    %86 = vmatpush1.xpose.msra.mxu0 0.0
    %87 = vmatprep.subr.mxu0 0.0
    %88 = vmatpush1.xpose.msra.mxu0 0.0
    %89 = vmatprep.subr.mxu0 0.0
    %90 = vmatpush1.xpose.msra.mxu0 0.0
    %91 = vmatprep.subr.mxu0 0.0
    %92 = vmatpush1.xpose.msra.mxu0 0.0
    %93 = vmatprep.subr.mxu0 0.0
    %94 = vmatpush1.xpose.msra.mxu0 0.0
    %95 = vmatprep.subr.mxu0 0.0
    %96 = vmatpush1.xpose.msra.mxu0 0.0
    %97 = vmatprep.subr.mxu0 0.0
    %98 = vmatpush1.xpose.msra.mxu0 0.0
    %99 = vmatprep.subr.mxu0 0.0
    %100 = vmatpush1.xpose.msra.mxu0 0.0
    %101 = vmatprep.subr.mxu0 0.0
    %102 = vmatpush1.xpose.msra.mxu0 0.0
    %103 = vmatprep.subr.mxu0 0.0
    %104 = vmatpush1.xpose.msra.mxu0 0.0
    %105 = vmatprep.subr.mxu0 0.0
    %106 = vmatpush1.xpose.msra.mxu0 0.0
    %107 = vmatprep.subr.mxu0 0.0
    %108 = vmatpush1.xpose.msra.mxu0 0.0
    %109 = vmatprep.subr.mxu0 0.0
    %110 = vmatpush1.xpose.msra.mxu0 0.0
    %111 = vmatprep.subr.mxu0 0.0
    %112 = vmatpush1.xpose.msra.mxu0 0.0
    %113 = vmatprep.subr.mxu0 0.0
    %114 = vmatpush1.xpose.msra.mxu0 0.0
    %115 = vmatprep.subr.mxu0 0.0
    %116 = vmatpush1.xpose.msra.mxu0 0.0
    %117 = vmatprep.subr.mxu0 0.0
    %118 = vmatpush1.xpose.msra.mxu0 0.0
    %119 = vmatprep.subr.mxu0 0.0
    %120 = vmatpush1.xpose.msra.mxu0 0.0
    %121 = vmatprep.subr.mxu0 0.0
    %122 = vmatpush1.xpose.msra.mxu0 0.0
    %123 = vmatprep.subr.mxu0 0.0
    %124 = vmatpush1.xpose.msra.mxu0 0.0
    %125 = vmatprep.subr.mxu0 0.0
    %126 = vmatpush1.xpose.msra.mxu0 0.0
    %127 = vmatprep.subr.mxu0 0.0
    %128 = vmatpush1.xpose.msra.mxu0 0.0
    %129 = vmatprep.subr.mxu0 0.0
    %130 = vmatpush1.xpose.msra.mxu0 0.0
    %131 = vmatprep.subr.mxu0 0.0
    %132 = vmatpush1.xpose.msra.mxu0 0.0
    %133 = vmatprep.subr.mxu0 0.0
    %134 = vmatpush1.xpose.msra.mxu0 0.0
    %135 = vmatprep.subr.mxu0 0.0
    %136 = vmatpush1.xpose.msra.mxu0 0.0
    %137 = vmatprep.subr.mxu0 0.0
    %138 = vmatpush1.xpose.msra.mxu0 0.0
    %139 = vmatprep.mubr.f32.mxu0 0.0
    %140 = vmatmul.mubr.f32.gmra.mrb[0].mxu0 %v70
    %v141 = vpop.f32.mrb[0].mxu0
    %v142 = vadd.f32 0.0, %v141
    %v143 = vpop.f32.mrb[0].mxu0
    %144 = vdwg.mxu0
    %v146 = vsel %vm68, %v63, 0
    %v149 = vsel %vm68, %v65, 0
    %151 = vmatprep.subr.mxu0 0.0
    %152 = vmatpush1.xpose.msra.mxu0 %v149
    %153 = vmatprep.subr.mxu0 0.0
    %154 = vmatpush1.xpose.msra.mxu0 0.0
    %155 = vmatprep.subr.mxu0 0.0
    %156 = vmatpush1.xpose.msra.mxu0 0.0
    %157 = vmatprep.subr.mxu0 0.0
    %158 = vmatpush1.xpose.msra.mxu0 0.0
    %159 = vmatprep.subr.mxu0 0.0
    %160 = vmatpush1.xpose.msra.mxu0 0.0
    %161 = vmatprep.subr.mxu0 0.0
    %162 = vmatpush1.xpose.msra.mxu0 0.0
    %163 = vmatprep.subr.mxu0 0.0
    %164 = vmatpush1.xpose.msra.mxu0 0.0
    %165 = vmatprep.subr.mxu0 0.0
    %166 = vmatpush1.xpose.msra.mxu0 0.0
    %167 = vmatprep.subr.mxu0 0.0
    %168 = vmatpush1.xpose.msra.mxu0 0.0
    %169 = vmatprep.subr.mxu0 0.0
    %170 = vmatpush1.xpose.msra.mxu0 0.0
    %171 = vmatprep.subr.mxu0 0.0
    %172 = vmatpush1.xpose.msra.mxu0 0.0
    %173 = vmatprep.subr.mxu0 0.0
    %174 = vmatpush1.xpose.msra.mxu0 0.0
    %175 = vmatprep.subr.mxu0 0.0
    %176 = vmatpush1.xpose.msra.mxu0 0.0
    %177 = vmatprep.subr.mxu0 0.0
    %178 = vmatpush1.xpose.msra.mxu0 0.0
    %179 = vmatprep.subr.mxu0 0.0
    %180 = vmatpush1.xpose.msra.mxu0 0.0
    %181 = vmatprep.subr.mxu0 0.0
    %182 = vmatpush1.xpose.msra.mxu0 0.0
    %183 = vmatprep.subr.mxu0 0.0
    %184 = vmatpush1.xpose.msra.mxu0 0.0
    %185 = vmatprep.subr.mxu0 0.0
    %186 = vmatpush1.xpose.msra.mxu0 0.0
    %187 = vmatprep.subr.mxu0 0.0
    %188 = vmatpush1.xpose.msra.mxu0 0.0
    %189 = vmatprep.subr.mxu0 0.0
    %190 = vmatpush1.xpose.msra.mxu0 0.0
    %191 = vmatprep.subr.mxu0 0.0
    %192 = vmatpush1.xpose.msra.mxu0 0.0
    %193 = vmatprep.subr.mxu0 0.0
    %194 = vmatpush1.xpose.msra.mxu0 0.0
    %195 = vmatprep.subr.mxu0 0.0
    %196 = vmatpush1.xpose.msra.mxu0 0.0
    %197 = vmatprep.subr.mxu0 0.0
    %198 = vmatpush1.xpose.msra.mxu0 0.0
    %199 = vmatprep.subr.mxu0 0.0
    %200 = vmatpush1.xpose.msra.mxu0 0.0
    %201 = vmatprep.subr.mxu0 0.0
    %202 = vmatpush1.xpose.msra.mxu0 0.0
    %203 = vmatprep.subr.mxu0 0.0
    %204 = vmatpush1.xpose.msra.mxu0 0.0
    %205 = vmatprep.subr.mxu0 0.0
    %206 = vmatpush1.xpose.msra.mxu0 0.0
    %207 = vmatprep.subr.mxu0 0.0
    %208 = vmatpush1.xpose.msra.mxu0 0.0
    %209 = vmatprep.subr.mxu0 0.0
    %210 = vmatpush1.xpose.msra.mxu0 0.0
    %211 = vmatprep.subr.mxu0 0.0
    %212 = vmatpush1.xpose.msra.mxu0 0.0
    %213 = vmatprep.subr.mxu0 0.0
    %214 = vmatpush1.xpose.msra.mxu0 0.0
    %215 = vmatprep.mubr.f32.mxu0 0.0
    %216 = vmatmul.mubr.f32.gmra.mrb[0].mxu0 %v146
    %v217 = vpop.f32.mrb[0].mxu0
    %v218 = vadd.f32 0.0, %v217
    %v219 = vpop.f32.mrb[0].mxu0
    %220 = vdwg.mxu0
    %v221 = vmul.f32 %v142, 0.17677669
    %v222 = vmul.f32 %v218, 0.17677669
    %v223 = vld [vmem:[%s0] sm:$0x1]
    %v224 = vld [vmem:[%s0 + $0x1] sm:$0x1]
    %v225 = vlaneseq
    %v226 = vand.u32 %v225, 127
    %227 = vset.pattern.permute.xlu0 0
    %228 = vperm.xlu0 %227, %v223
    %v229 = vpop.permute.xlu0 %228
    %v230 = vlaneseq
    %v231 = vshrl.u32 %v230, 7
    %v232 = vsub.s32 0, %v231
    %v233 = vrot.slane %v229, %v232
    %234 = vset.pattern.permute.xlu0 0
    %235 = vperm.xlu0 %234, %v224
    %v236 = vpop.permute.xlu0 %235
    %v237 = vlaneseq
    %v238 = vshrl.u32 %v237, 7
    %v239 = vsub.s32 0, %v238
    %v240 = vrot.slane %v236, %v239
    %vm241 = vcmp.lt.s32.totalorder %v226, %v233
    %vm242 = vcmp.lt.s32.totalorder %v226, %v240
    %v243 = vsel %vm241, 1, 0
    %v244 = vsel %vm242, 1, 0
    %vm245 = vcmp.eq.s32.totalorder %v243, 1
    %vm246 = vcmp.eq.s32.totalorder %v244, 1
    %v247 = vsel %vm245, %v221, -1000000.0
    %v248 = vsel %vm246, %v222, -1000000.0
    %vm249 = vcmask 64512
    %v250 = vsel %vm249, %v247, -inf
    %251 = vmax.xlane.f32.xlu0 %v250
    %v252 = vpop.xlane.xlu0 %251
    %v253 = vsel %vm249, %v248, -inf
    %254 = vmax.xlane.f32.xlu0 %v253
    %v255 = vpop.xlane.xlu0 %254
    %v256 = vsub.f32 %v247, %v252
    %v257 = vsub.f32 %v248, %v255
    %v258 = vmul.f32 %v256, 1.442695
    %v259 = vpow.pop %v258
    %v260 = vmul.f32 %v257, 1.442695
    %v261 = vpow.pop %v260
    %v262 = vsel %vm249, %v259, 0.0
    %263 = vadd.xlane.f32.xlu0 %v262
    %v264 = vpop.xlane.xlu0 %263
    %v265 = vsel %vm249, %v261, 0.0
    %266 = vadd.xlane.f32.xlu0 %v265
    %v267 = vpop.xlane.xlu0 %266
    %v268 = vrcp.pop %v264
    %v269 = vrcp.pop %v267
    %v270 = vmul.f32 %v259, %v268
    %v271 = vmul.f32 %v261, %v269
    %v273 = vsel %vm249, %v270, 0
    %275 = vmatprep.subr.mxu0 0.0
    %276 = vmatpush1.msra.mxu0 %v66
    %277 = vmatprep.subr.mxu0 0.0
    %278 = vmatpush1.msra.mxu0 0.0
    %279 = vmatprep.subr.mxu0 0.0
    %280 = vmatpush1.msra.mxu0 0.0
    %281 = vmatprep.subr.mxu0 0.0
    %282 = vmatpush1.msra.mxu0 0.0
    %283 = vmatprep.subr.mxu0 0.0
    %284 = vmatpush1.msra.mxu0 0.0
    %285 = vmatprep.subr.mxu0 0.0
    %286 = vmatpush1.msra.mxu0 0.0
    %287 = vmatprep.subr.mxu0 0.0
    %288 = vmatpush1.msra.mxu0 0.0
    %289 = vmatprep.subr.mxu0 0.0
    %290 = vmatpush1.msra.mxu0 0.0
    %291 = vmatprep.subr.mxu0 0.0
    %292 = vmatpush1.msra.mxu0 0.0
    %293 = vmatprep.subr.mxu0 0.0
    %294 = vmatpush1.msra.mxu0 0.0
    %295 = vmatprep.subr.mxu0 0.0
    %296 = vmatpush1.msra.mxu0 0.0
    %297 = vmatprep.subr.mxu0 0.0
    %298 = vmatpush1.msra.mxu0 0.0
    %299 = vmatprep.subr.mxu0 0.0
    %300 = vmatpush1.msra.mxu0 0.0
    %301 = vmatprep.subr.mxu0 0.0
    %302 = vmatpush1.msra.mxu0 0.0
    %303 = vmatprep.subr.mxu0 0.0
    %304 = vmatpush1.msra.mxu0 0.0
    %305 = vmatprep.subr.mxu0 0.0
    %306 = vmatpush1.msra.mxu0 0.0
    %307 = vmatprep.subr.mxu0 0.0
    %308 = vmatpush1.msra.mxu0 0.0
    %309 = vmatprep.subr.mxu0 0.0
    %310 = vmatpush1.msra.mxu0 0.0
    %311 = vmatprep.subr.mxu0 0.0
    %312 = vmatpush1.msra.mxu0 0.0
    %313 = vmatprep.subr.mxu0 0.0
    %314 = vmatpush1.msra.mxu0 0.0
    %315 = vmatprep.subr.mxu0 0.0
    %316 = vmatpush1.msra.mxu0 0.0
    %317 = vmatprep.subr.mxu0 0.0
    %318 = vmatpush1.msra.mxu0 0.0
    %319 = vmatprep.subr.mxu0 0.0
    %320 = vmatpush1.msra.mxu0 0.0
    %321 = vmatprep.subr.mxu0 0.0
    %322 = vmatpush1.msra.mxu0 0.0
    %323 = vmatprep.subr.mxu0 0.0
    %324 = vmatpush1.msra.mxu0 0.0
    %325 = vmatprep.subr.mxu0 0.0
    %326 = vmatpush1.msra.mxu0 0.0
    %327 = vmatprep.subr.mxu0 0.0
    %328 = vmatpush1.msra.mxu0 0.0
    %329 = vmatprep.subr.mxu0 0.0
    %330 = vmatpush1.msra.mxu0 0.0
    %331 = vmatprep.subr.mxu0 0.0
    %332 = vmatpush1.msra.mxu0 0.0
    %333 = vmatprep.subr.mxu0 0.0
    %334 = vmatpush1.msra.mxu0 0.0
    %335 = vmatprep.subr.mxu0 0.0
    %336 = vmatpush1.msra.mxu0 0.0
    %337 = vmatprep.subr.mxu0 0.0
    %338 = vmatpush1.msra.mxu0 0.0
    %339 = vmatprep.mubr.f32.mxu0 0.0
    %340 = vmatmul.mubr.f32.gmra.mrb[0].mxu0 %v273
    %v341 = vpop.f32.mrb[0].mxu0
    %v342 = vadd.f32 0.0, %v341
    %v343 = vpop.f32.mrb[0].mxu0
    %344 = vdwg.mxu0
    %v346 = vsel %vm249, %v271, 0
    %348 = vmatprep.subr.mxu0 0.0
    %349 = vmatpush1.msra.mxu0 %v67
    %350 = vmatprep.subr.mxu0 0.0
    %351 = vmatpush1.msra.mxu0 0.0
    %352 = vmatprep.subr.mxu0 0.0
    %353 = vmatpush1.msra.mxu0 0.0
    %354 = vmatprep.subr.mxu0 0.0
    %355 = vmatpush1.msra.mxu0 0.0
    %356 = vmatprep.subr.mxu0 0.0
    %357 = vmatpush1.msra.mxu0 0.0
    %358 = vmatprep.subr.mxu0 0.0
    %359 = vmatpush1.msra.mxu0 0.0
    %360 = vmatprep.subr.mxu0 0.0
    %361 = vmatpush1.msra.mxu0 0.0
    %362 = vmatprep.subr.mxu0 0.0
    %363 = vmatpush1.msra.mxu0 0.0
    %364 = vmatprep.subr.mxu0 0.0
    %365 = vmatpush1.msra.mxu0 0.0
    %366 = vmatprep.subr.mxu0 0.0
    %367 = vmatpush1.msra.mxu0 0.0
    %368 = vmatprep.subr.mxu0 0.0
    %369 = vmatpush1.msra.mxu0 0.0
    %370 = vmatprep.subr.mxu0 0.0
    %371 = vmatpush1.msra.mxu0 0.0
    %372 = vmatprep.subr.mxu0 0.0
    %373 = vmatpush1.msra.mxu0 0.0
    %374 = vmatprep.subr.mxu0 0.0
    %375 = vmatpush1.msra.mxu0 0.0
    %376 = vmatprep.subr.mxu0 0.0
    %377 = vmatpush1.msra.mxu0 0.0
    %378 = vmatprep.subr.mxu0 0.0
    %379 = vmatpush1.msra.mxu0 0.0
    %380 = vmatprep.subr.mxu0 0.0
    %381 = vmatpush1.msra.mxu0 0.0
    %382 = vmatprep.subr.mxu0 0.0
    %383 = vmatpush1.msra.mxu0 0.0
    %384 = vmatprep.subr.mxu0 0.0
    %385 = vmatpush1.msra.mxu0 0.0
    %386 = vmatprep.subr.mxu0 0.0
    %387 = vmatpush1.msra.mxu0 0.0
    %388 = vmatprep.subr.mxu0 0.0
    %389 = vmatpush1.msra.mxu0 0.0
    %390 = vmatprep.subr.mxu0 0.0
    %391 = vmatpush1.msra.mxu0 0.0
    %392 = vmatprep.subr.mxu0 0.0
    %393 = vmatpush1.msra.mxu0 0.0
    %394 = vmatprep.subr.mxu0 0.0
    %395 = vmatpush1.msra.mxu0 0.0
    %396 = vmatprep.subr.mxu0 0.0
    %397 = vmatpush1.msra.mxu0 0.0
    %398 = vmatprep.subr.mxu0 0.0
    %399 = vmatpush1.msra.mxu0 0.0
    %400 = vmatprep.subr.mxu0 0.0
    %401 = vmatpush1.msra.mxu0 0.0
    %402 = vmatprep.subr.mxu0 0.0
    %403 = vmatpush1.msra.mxu0 0.0
    %404 = vmatprep.subr.mxu0 0.0
    %405 = vmatpush1.msra.mxu0 0.0
    %406 = vmatprep.subr.mxu0 0.0
    %407 = vmatpush1.msra.mxu0 0.0
    %408 = vmatprep.subr.mxu0 0.0
    %409 = vmatpush1.msra.mxu0 0.0
    %410 = vmatprep.subr.mxu0 0.0
    %411 = vmatpush1.msra.mxu0 0.0
    %412 = vmatprep.mubr.f32.mxu0 0.0
    %413 = vmatmul.mubr.f32.gmra.mrb[0].mxu0 %v346
    %v414 = vpop.f32.mrb[0].mxu0
    %v415 = vadd.f32 0.0, %v414
    %v416 = vpop.f32.mrb[0].mxu0
    %417 = vdwg.mxu0
    %418 = vst.msk [vmem:[#allocation8] sm:$0xff] %vm68, %v342
    %419 = vst.msk [vmem:[#allocation8 + $0x8] sm:$0xff] %vm68, %v415
    %420 = vst.msk [vmem:[#allocation9] sm:$0xff] %vm249, %v270
    %421 = vst.msk [vmem:[#allocation9 + $0x8] sm:$0xff] %vm249, %v271
    // Predicated region
    $region30: #{tpu_custom_call.1} parent=1 // pred_check
      _
    $region31: #{tpu_custom_call.1} parent=1 // pred_check_branch
      %423 = sbr.rel (0) target = $region33
    $region32: #{tpu_custom_call.1} parent=1 // pred_region
      %s425 = ssub.s32 256, 256
      %426 = vsyncadd [#allocation4], %s425
      %s427 = sshll.u32 [#allocation8], 4
      %s428 = int_to_ptr.vmem [resolvable:$true] %s427
      %433 = dma.vmem_to_hbm [thread:$0]  %s428, 256, %s4, [#allocation4], 128, 128, 8
    $region33: #{tpu_custom_call.1} parent=1 // pred_fallthru
      _
    // Predicated region
    $region34: #{tpu_custom_call.1} parent=1 // pred_check
      _
    $region35: #{tpu_custom_call.1} parent=1 // pred_check_branch
      %435 = sbr.rel (0) target = $region37
    $region36: #{tpu_custom_call.1} parent=1 // pred_region
      %s437 = ssub.s32 256, 256
      %438 = vsyncadd [#allocation10], %s437
      %s439 = sshll.u32 [#allocation9], 4
      %s440 = int_to_ptr.vmem [resolvable:$true] %s439
      %445 = dma.vmem_to_hbm [thread:$0]  %s440, 256, %s5, [#allocation10], 128, 128, 8
    $region37: #{tpu_custom_call.1} parent=1 // pred_fallthru
      _
    // Predicated region
    $region38: #{tpu_custom_call.1} parent=1 // pred_check
      _
    $region39: #{tpu_custom_call.1} parent=1 // pred_check_branch
      %447 = sbr.rel (0) target = $region41
    $region40: #{tpu_custom_call.1} parent=1 // pred_region
      %448 = dma.done [#allocation4], 256
    $region41: #{tpu_custom_call.1} parent=1 // pred_fallthru
      _
    // Predicated region
    $region42: #{tpu_custom_call.1} parent=1 // pred_check
      _
    $region43: #{tpu_custom_call.1} parent=1 // pred_check_branch
      %450 = sbr.rel (0) target = $region45
    $region44: #{tpu_custom_call.1} parent=1 // pred_region
      %451 = dma.done [#allocation10], 256
    $region45: #{tpu_custom_call.1} parent=1 // pred_fallthru
      _
    %452 = vsyncpa [#allocation3], 1
    %453 = vsyncpa [#allocation6], 1
    %454 = vsyncpa [#allocation4], 1
    %455 = vsyncpa [#allocation10], 1

</llo_original>
